<compile_context>
chip_gen: v7x
topology: tpu7x:2x2x1
jax: 0.10.0
libtpu: 0.0.40
codegen_flags: <defaults>
</compile_context>

<pallas_src>
import functools

import jax
import jax.numpy as jnp
from jax import lax
from jax.experimental import pallas as pl
from jax.experimental.pallas import tpu as pltpu


def _wsum_loss_kernel(x_ref, t_ref, w_ref, o_ref, acc_ref, *,
                      ns, tb, b, g, edge_tiles):
    """Grid = (parallel batch-chunk p, reduction step s).

    x_ref, t_ref : VMEM (TB, D)  row tiles of the flattened (B, D) tensors
    w_ref        : VMEM (1, D)   weights[c] / (B*F), repeated over F (resident)
    o_ref        : VMEM (1,1,1)  per-parallel-chunk partial loss
    acc_ref      : VMEM (1, D)   f32 per-lane partial sums (tiny)
    """
    p = pl.program_id(0)
    s = pl.program_id(1)

    def accumulate(mask_rows):
        diff = x_ref[...].astype(jnp.float32) - t_ref[...].astype(jnp.float32)
        sq = diff * diff
        if mask_rows:
            # Unclamped global tile index: for the partial last tile this zeroes
            # the garbage rows; for an overflow tile (odd tile count split over
            # two TensorCores) it zeroes everything.
            base = (p * ns + s) * tb
            rows = lax.broadcasted_iota(jnp.int32, sq.shape, 0)
            sq = jnp.where(rows < (b - base), sq, 0.0)
        row_sum = jnp.sum(sq, axis=0, keepdims=True)   # sublane reduce -> XLU

        @pl.when(s == 0)
        def _():
            acc_ref[...] = row_sum        # direct first write, no zero-init

        @pl.when(s != 0)
        def _():
            acc_ref[...] += row_sum

    if edge_tiles:
        is_edge = (p * ns + s) >= (g - 1)

        @pl.when(jnp.logical_not(is_edge))
        def _():
            accumulate(mask_rows=False)   # hot path: no iota/compare/select

        @pl.when(is_edge)
        def _():
            accumulate(mask_rows=True)
    else:
        accumulate(mask_rows=False)

    @pl.when(s == ns - 1)
    def _():
        # One weighted cross-lane reduce + tiny store per parallel chunk.
        val = jnp.sum(acc_ref[...] * w_ref[...])
        o_ref[...] = jnp.full((1, 1, 1), val, dtype=jnp.float32)


def _tpu_vmem_bytes():
    try:
        v = int(pltpu.get_tpu_info().vmem_capacity_bytes)
        if v > 0:
            return v
    except Exception:
        pass
    return 64 * 1024 * 1024   # conservative default: v7x per-TensorCore VMEM


def _num_tensorcores_per_chip():
    try:
        kind = jax.devices()[0].device_kind.lower()
        if "v7" in kind:
            return 2          # only v7x has 2 TensorCores per chip
    except Exception:
        pass
    return 1


def _pick_rows_per_step(b, d, itemsize, block_budget, max_rows=None):
    """Largest batch tile whose pipeline footprint stays inside the budget.

    Per-row footprint: 2 inputs x 2 pipeline buffers x itemsize (accumulator
    is a fixed tiny (1, D) row, not per-row)."""
    per_row = d * 4 * itemsize
    tb = max(1, block_budget // per_row)
    if max_rows is not None:
        tb = min(tb, max_rows)
    if tb >= b:
        return b                      # single full-extent block
    tb = (tb // 8) * 8                # sublane alignment for partial blocks
    if tb < 8:
        # TODO(synk): add a lane (D) tiling axis for extremely large C*F so
        # even an 8-row block fits the per-generation VMEM budget.
        tb = min(8, b)
    return tb


def weighted_sum_loss(outputs, targets, weights, *,
                      max_rows_per_step=None, _force_num_chunks=None):
    """outputs, targets: (B, C, ...); weights: length-C list/array."""
    assert outputs.shape == targets.shape
    b = outputs.shape[0]
    c = outputs.shape[1]
    feat = 1
    for dim in outputs.shape[2:]:
        feat *= dim
    d = c * feat
    itemsize = jnp.dtype(outputs.dtype).itemsize

    # Contiguous reshape only — no transpose, no extra HBM traffic.
    x2d = outputs.reshape(b, d)
    t2d = targets.reshape(b, d)

    # Fold the per-channel MSE mean 1/(B*feat) into the weights once.
    w = jnp.asarray(weights, dtype=jnp.float32) / float(b * feat)
    w2d = jnp.repeat(w, feat)[None, :]                     # (1, D), channel-major

    # Per-generation VMEM budgets (128 MiB on v5e/v6e, 64 MiB on v7x).
    vmem_bytes = _tpu_vmem_bytes()
    block_budget = min((vmem_bytes * 5) // 8, 80 * 1024 * 1024)
    vmem_limit = min((vmem_bytes * 3) // 4, 100 * 1024 * 1024)

    tb = _pick_rows_per_step(b, d, itemsize, block_budget, max_rows_per_step)
    g = pl.cdiv(b, tb)                                     # number of batch tiles

    want = _force_num_chunks if _force_num_chunks is not None \
        else _num_tensorcores_per_chip()
    np_ = 2 if (want >= 2 and g >= 2) else 1               # megacore chunks
    ns = pl.cdiv(g, np_)                                   # steps per chunk

    padded = (g * tb != b)        # last tile partially out of the batch
    overflow = (np_ * ns != g)    # odd tile count split across 2 TCs
    edge_tiles = padded or overflow

    if overflow:
        def in_idx(p, s):         # clamp so the overflow step reads a valid tile
            return (jnp.minimum(p * ns + s, g - 1), 0)
    else:
        def in_idx(p, s):
            return (p * ns + s, 0)

    kernel = functools.partial(_wsum_loss_kernel, ns=ns, tb=tb, b=b, g=g,
                               edge_tiles=edge_tiles)

    cost = pl.CostEstimate(
        flops=3 * b * d + 2 * d,
        transcendentals=0,
        bytes_accessed=2 * b * d * itemsize + 4 * d + 4 * np_,
    )

    out = pl.pallas_call(
        kernel,
        out_shape=jax.ShapeDtypeStruct((np_, 1, 1), jnp.float32),
        grid=(np_, ns),
        in_specs=[
            pl.BlockSpec((tb, d), in_idx),
            pl.BlockSpec((tb, d), in_idx),
            pl.BlockSpec((1, d), lambda p, s: (0, 0)),     # resident weights
        ],
        out_specs=pl.BlockSpec((1, 1, 1), lambda p, s: (p, 0, 0)),
        scratch_shapes=[pltpu.VMEM((1, d), jnp.float32)],
        compiler_params=pltpu.CompilerParams(
            dimension_semantics=("parallel", "arbitrary"),
            vmem_limit_bytes=int(vmem_limit),
        ),
        cost_estimate=cost,
    )(x2d, t2d, w2d)

    return jnp.sum(out)   # combine per-TensorCore partials


def _reference(outputs, targets, weights):
    c = outputs.shape[1]
    losses = [jnp.mean((outputs[:, i] - targets[:, i]) ** 2) for i in range(c)]
    return sum(weights[i] * losses[i] for i in range(c))


if __name__ == "__main__":
    key = jax.random.PRNGKey(0)
    k1, k2 = jax.random.split(key)

    B, C, F = 60, 4, 32
    outputs = jax.random.normal(k1, (B, C, F), dtype=jnp.float32)
    targets = jax.random.normal(k2, (B, C, F), dtype=jnp.float32)
    weights = [0.1, 0.2, 0.3, 0.4]

    ref = _reference(outputs, targets, weights)

    # 1) Default path: single full-batch block (split across TCs only on v7x).
    loss = jax.block_until_ready(weighted_sum_loss(outputs, targets, weights))
    assert jnp.allclose(loss, ref, rtol=1e-5, atol=1e-6), (loss, ref)

    # 2) Tiled path, two parallel chunks, even tile count, partial last tile.
    loss_even = jax.block_until_ready(
        weighted_sum_loss(outputs, targets, weights,
                          max_rows_per_step=16, _force_num_chunks=2))
    assert jnp.allclose(loss_even, ref, rtol=1e-5, atol=1e-6), (loss_even, ref)

    # 3) Tiled path, two parallel chunks, ODD tile count — exercises the
    #    clamped index_map + overflow-tile guard used for the v7x split.
    loss_odd = jax.block_until_ready(
        weighted_sum_loss(outputs, targets, weights,
                          max_rows_per_step=24, _force_num_chunks=2))
    assert jnp.allclose(loss_odd, ref, rtol=1e-5, atol=1e-6), (loss_odd, ref)

    print("KERNEL_OK")
</pallas_src>

<mosaic_0001>
module attributes {stable_mosaic.version = 11 : i64} {
  func.func @_wsum_loss_kernel(%arg0: i32, %arg1: i32, %arg2: memref<60x128xf32, #tpu.memory_space<vmem>>, %arg3: memref<60x128xf32, #tpu.memory_space<vmem>>, %arg4: memref<1x128xf32, #tpu.memory_space<vmem>>, %arg5: memref<1x1x1xf32, #tpu.memory_space<vmem>>, %arg6: memref<1x128xf32, #tpu.memory_space<vmem>>) attributes {dimension_semantics = [#tpu.dimension_semantics<parallel>, #tpu.dimension_semantics<arbitrary>], iteration_bounds = array<i64: 1, 1>, scalar_prefetch = 0 : i64, scratch_operands = 1 : i64, tpu.core_type = #tpu.core_type<tc>, window_params = [{transform_indices = @transform_0, window_bounds = array<i64: 60, 128>}, {transform_indices = @transform_1, window_bounds = array<i64: 60, 128>}, {pipeline_mode = #tpu.pipeline_mode<synchronous>, transform_indices = @transform_2, window_bounds = array<i64: 1, 128>}, {transform_indices = @transform_3, window_bounds = array<i64: 1, 1, 1>}]} {
    %c0 = arith.constant 0 : index
    %c0_0 = arith.constant 0 : index
    %0 = vector.load %arg2[%c0, %c0_0] : memref<60x128xf32, #tpu.memory_space<vmem>>, vector<60x128xf32>
    %c0_1 = arith.constant 0 : index
    %c0_2 = arith.constant 0 : index
    %1 = vector.load %arg3[%c0_1, %c0_2] : memref<60x128xf32, #tpu.memory_space<vmem>>, vector<60x128xf32>
    %2 = arith.subf %0, %1 : vector<60x128xf32>
    %3 = arith.mulf %2, %2 : vector<60x128xf32>
    %cst = arith.constant dense<0.000000e+00> : vector<128xf32>
    %4 = vector.multi_reduction <add>, %3, %cst [0] : vector<60x128xf32> to vector<128xf32>
    %5 = vector.shape_cast %4 : vector<128xf32> to vector<1x128xf32>
    %c0_i32 = arith.constant 0 : i32
    %6 = arith.cmpi eq, %arg1, %c0_i32 : i32
    %7 = arith.extui %6 : i1 to i32
    %c0_i32_3 = arith.constant 0 : i32
    %8 = arith.cmpi ne, %7, %c0_i32_3 : i32
    scf.if %8 {
      %c0_8 = arith.constant 0 : index
      %c0_9 = arith.constant 0 : index
      %15 = vector.load %arg6[%c0_8, %c0_9] : memref<1x128xf32, #tpu.memory_space<vmem>>, vector<1x128xf32>
      tpu.vector_store %arg6[%c0_8, %c0_9], %5 {strides = array<i32>} : memref<1x128xf32, #tpu.memory_space<vmem>>, vector<1x128xf32>,
    } else {
    }
    %c0_i32_4 = arith.constant 0 : i32
    %9 = arith.cmpi ne, %arg1, %c0_i32_4 : i32
    %10 = arith.extui %9 : i1 to i32
    %c0_i32_5 = arith.constant 0 : i32
    %11 = arith.cmpi ne, %10, %c0_i32_5 : i32
    scf.if %11 {
      %c0_8 = arith.constant 0 : index
      %c0_9 = arith.constant 0 : index
      %15 = vector.load %arg6[%c0_8, %c0_9] : memref<1x128xf32, #tpu.memory_space<vmem>>, vector<1x128xf32>
      %16 = arith.addf %15, %5 : vector<1x128xf32>
      %c0_10 = arith.constant 0 : index
      %c0_11 = arith.constant 0 : index
      %17 = vector.load %arg6[%c0_10, %c0_11] : memref<1x128xf32, #tpu.memory_space<vmem>>, vector<1x128xf32>
      tpu.vector_store %arg6[%c0_10, %c0_11], %16 {strides = array<i32>} : memref<1x128xf32, #tpu.memory_space<vmem>>, vector<1x128xf32>,
    } else {
    }
    %c0_i32_6 = arith.constant 0 : i32
    %12 = arith.cmpi eq, %arg1, %c0_i32_6 : i32
    %13 = arith.extui %12 : i1 to i32
    %c0_i32_7 = arith.constant 0 : i32
    %14 = arith.cmpi ne, %13, %c0_i32_7 : i32
    scf.if %14 {
      %c0_8 = arith.constant 0 : index
      %c0_9 = arith.constant 0 : index
      %15 = vector.load %arg6[%c0_8, %c0_9] : memref<1x128xf32, #tpu.memory_space<vmem>>, vector<1x128xf32>
      %c0_10 = arith.constant 0 : index
      %c0_11 = arith.constant 0 : index
      %16 = vector.load %arg4[%c0_10, %c0_11] : memref<1x128xf32, #tpu.memory_space<vmem>>, vector<1x128xf32>
      %17 = arith.mulf %15, %16 : vector<1x128xf32>
      %18 = vector.shape_cast %17 : vector<1x128xf32> to vector<1x1x128xf32>
      %cst_12 = arith.constant dense<0.000000e+00> : vector<1xf32>
      %19 = vector.multi_reduction <add>, %18, %cst_12 [1, 2] : vector<1x1x128xf32> to vector<1xf32>
      %20 = vector.shape_cast %19 : vector<1xf32> to vector<1x1x1xf32>
      %21 = vector.extract %20[0, 0, 0] : f32 from vector<1x1x1xf32>
      %22 = vector.broadcast %21 : f32 to vector<1x1x1xf32>
      %c0_13 = arith.constant 0 : index
      %c0_14 = arith.constant 0 : index
      %c0_15 = arith.constant 0 : index
      %23 = vector.load %arg5[%c0_13, %c0_14, %c0_15] : memref<1x1x1xf32, #tpu.memory_space<vmem>>, vector<1x1x1xf32>
      tpu.vector_store %arg5[%c0_13, %c0_14, %c0_15], %22 {strides = array<i32>} : memref<1x1x1xf32, #tpu.memory_space<vmem>>, vector<1x1x1xf32>,
    } else {
    }
    return
  }
  func.func @transform_0(%arg0: i32, %arg1: i32) -> (i32, i32) {
    %c1_i32 = arith.constant 1 : i32
    %0 = arith.muli %arg0, %c1_i32 : i32
    %1 = arith.addi %0, %arg1 : i32
    %c0_i32 = arith.constant 0 : i32
    %c0_i32_0 = arith.constant 0 : i32
    return %1, %c0_i32 : i32, i32
  }
  func.func @transform_1(%arg0: i32, %arg1: i32) -> (i32, i32) {
    %c1_i32 = arith.constant 1 : i32
    %0 = arith.muli %arg0, %c1_i32 : i32
    %1 = arith.addi %0, %arg1 : i32
    %c0_i32 = arith.constant 0 : i32
    %c0_i32_0 = arith.constant 0 : i32
    return %1, %c0_i32 : i32, i32
  }
  func.func @transform_2(%arg0: i32, %arg1: i32) -> (i32, i32) {
    %c0_i32 = arith.constant 0 : i32
    %c0_i32_0 = arith.constant 0 : i32
    %c0_i32_1 = arith.constant 0 : i32
    return %c0_i32, %c0_i32_0 : i32, i32
  }
  func.func @transform_3(%arg0: i32, %arg1: i32) -> (i32, i32, i32) {
    %c0_i32 = arith.constant 0 : i32
    %c0_i32_0 = arith.constant 0 : i32
    %c0_i32_1 = arith.constant 0 : i32
    return %arg0, %c0_i32, %c0_i32_0 : i32, i32, i32
  }
}

</mosaic_0001>

<llo_original>
// kernel: tpu_custom_call.1
$region0: #{tpu_custom_call.1}
  #allocation0 [shape = 'u32[]', space=smem, size = 0x4, offset = 0x4, fixed_abs, tag = 'smem constant byte address 0x4 - core index']
  #allocation1 [shape = 'u32[144,128]{1,0:T(1,128)}', space=vmem, size = 0x12000, scoped, tag = 'internal scratch']
  #allocation2 [shape = 'f32[1,128]{1,0:T(1,128)}', space=vmem, size = 0x200, scoped, tag = 'scratch operand']
  %s0 = inlined_call_operand.hbm [shape: f32[60,128], index: 0, kind: input, shape index: {}]
  %s1 = inlined_call_operand.hbm [shape: f32[60,128], index: 1, kind: input, shape index: {}]
  %s2 = inlined_call_operand.vmem [shape: f32[1,128], index: 2, kind: input, shape index: {}]
  %s3 = inlined_call_operand.hbm [shape: f32[1,1,1], index: 3, kind: output, shape index: {}]
  %s4 = sld [smem:[#allocation0]]
  $region42: #{tpu_custom_call.1} parent=0
    _
  %s6 = ssub.s32 1, %s4
  %s7 = scalar_select 0, %s6, %s4
  $region1: #{tpu_custom_call.1} parent=0
    #allocation3 [shape = 'u8[32768]{0}', space=vmem, size = 0x8000, scoped, tag = 'input window, operand 0, single buffered']
    #allocation4 [shape = 's32[1]{0}', space=sflag, size = 0x4, scoped, tag = 'scoped memory for tpu_custom_call.1']
    #allocation5 [shape = 's32[1]{0}', space=sflag, size = 0x4, scoped, tag = 'scoped memory for tpu_custom_call.1']
    #allocation6 [shape = 'u8[32768]{0}', space=vmem, size = 0x8000, scoped, tag = 'input window, operand 1, single buffered']
    #allocation7 [shape = 's32[1]{0}', space=sflag, size = 0x4, scoped, tag = 'scoped memory for tpu_custom_call.1']
    #allocation8 [shape = 'u8[512]{0}', space=vmem, size = 0x400, scoped, tag = 'output window, operand 0, single buffered']
    %8 = vsyncpa [#allocation4], 0
    %9 = vsyncpa [#allocation7], 0
    %10 = vsyncpa [#allocation5], 0
    // Predicated region
    $region2: #{tpu_custom_call.1} parent=1 // pred_check
      _
    $region3: #{tpu_custom_call.1} parent=1 // pred_check_branch
      %12 = sbr.rel (0) target = $region5
    $region4: #{tpu_custom_call.1} parent=1 // pred_region
      %s13 = sadd.s32 0, 0
      %s14 = smul.u32 8, %s13
      %s16 = ssub.s32 1024, 1024
      %17 = vsyncadd [#allocation4], %s16
      %s18 = smul.addr %s14, 128
      %s19 = scalar_lea.hbm %s0, %s18
      %s20 = sshll.u32 [#allocation3], 4
      %s21 = int_to_ptr.vmem [resolvable:$true] %s20
      %26 = dma.hbm_to_vmem [thread:$0]  %s19, 1024, %s21, [#allocation4], 128, 128, 8
    $region5: #{tpu_custom_call.1} parent=1 // pred_fallthru
      _
    // Predicated region
    $region6: #{tpu_custom_call.1} parent=1 // pred_check
      _
    $region7: #{tpu_custom_call.1} parent=1 // pred_check_branch
      %28 = sbr.rel (0) target = $region9
    $region8: #{tpu_custom_call.1} parent=1 // pred_region
      %s29 = sadd.s32 0, 0
      %s30 = smul.u32 8, %s29
      %s32 = ssub.s32 1024, 1024
      %33 = vsyncadd [#allocation7], %s32
      %s34 = smul.addr %s30, 128
      %s35 = scalar_lea.hbm %s1, %s34
      %s36 = sshll.u32 [#allocation6], 4
      %s37 = int_to_ptr.vmem [resolvable:$true] %s36
      %42 = dma.hbm_to_vmem [thread:$0]  %s35, 1024, %s37, [#allocation7], 128, 128, 8
    $region9: #{tpu_custom_call.1} parent=1 // pred_fallthru
      _
    // Predicated region
    $region10: #{tpu_custom_call.1} parent=1 // pred_check
      _
    $region11: #{tpu_custom_call.1} parent=1 // pred_check_branch
      %44 = sbr.rel (0) target = $region13
    $region12: #{tpu_custom_call.1} parent=1 // pred_region
      _
    $region13: #{tpu_custom_call.1} parent=1 // pred_fallthru
      _
    // Predicated region
    $region14: #{tpu_custom_call.1} parent=1 // pred_check
      _
    $region15: #{tpu_custom_call.1} parent=1 // pred_check_branch
      %46 = sbr.rel (0) target = $region17
    $region16: #{tpu_custom_call.1} parent=1 // pred_region
      %47 = dma.done [#allocation4], 1024
    $region17: #{tpu_custom_call.1} parent=1 // pred_fallthru
      _
    // Predicated region
    $region18: #{tpu_custom_call.1} parent=1 // pred_check
      _
    $region19: #{tpu_custom_call.1} parent=1 // pred_check_branch
      %49 = sbr.rel (0) target = $region21
    $region20: #{tpu_custom_call.1} parent=1 // pred_region
      %50 = dma.done [#allocation7], 1024
    $region21: #{tpu_custom_call.1} parent=1 // pred_fallthru
      _
    %s51 = sadd.s32 0, 0
    %s52 = smul.u32 8, %s51
    %s53 = sadd.s32 0, 0
    %s54 = smul.u32 8, %s53
    %v55 = vld [vmem:[#allocation3] sm:$0xff]
    %v56 = vld [vmem:[#allocation3 + $0x8] sm:$0xff]
    %v57 = vld [vmem:[#allocation3 + $0x10] sm:$0xff]
    %v58 = vld [vmem:[#allocation3 + $0x18] sm:$0xff]
    %v59 = vld [vmem:[#allocation3 + $0x20] sm:$0xff]
    %v60 = vld [vmem:[#allocation3 + $0x28] sm:$0xff]
    %v61 = vld [vmem:[#allocation3 + $0x30] sm:$0xff]
    %v62 = vld [vmem:[#allocation3 + $0x38] sm:$0xf]
    %v63 = vld [vmem:[#allocation6] sm:$0xff]
    %v64 = vld [vmem:[#allocation6 + $0x8] sm:$0xff]
    %v65 = vld [vmem:[#allocation6 + $0x10] sm:$0xff]
    %v66 = vld [vmem:[#allocation6 + $0x18] sm:$0xff]
    %v67 = vld [vmem:[#allocation6 + $0x20] sm:$0xff]
    %v68 = vld [vmem:[#allocation6 + $0x28] sm:$0xff]
    %v69 = vld [vmem:[#allocation6 + $0x30] sm:$0xff]
    %v70 = vld [vmem:[#allocation6 + $0x38] sm:$0xf]
    %v71 = vsub.f32 %v55, %v63
    %v72 = vsub.f32 %v56, %v64
    %v73 = vsub.f32 %v57, %v65
    %v74 = vsub.f32 %v58, %v66
    %v75 = vsub.f32 %v59, %v67
    %v76 = vsub.f32 %v60, %v68
    %v77 = vsub.f32 %v61, %v69
    %v78 = vsub.f32 %v62, %v70
    %v79 = vmul.f32 %v71, %v71
    %v80 = vmul.f32 %v72, %v72
    %v81 = vmul.f32 %v73, %v73
    %v82 = vmul.f32 %v74, %v74
    %v83 = vmul.f32 %v75, %v75
    %v84 = vmul.f32 %v76, %v76
    %v85 = vmul.f32 %v77, %v77
    %v86 = vmul.f32 %v78, %v78
    %v87 = vadd.f32 %v79, %v80
    %v88 = vadd.f32 %v87, %v81
    %v89 = vadd.f32 %v88, %v82
    %v90 = vadd.f32 %v89, %v83
    %v91 = vadd.f32 %v90, %v84
    %v92 = vadd.f32 %v91, %v85
    %vm93 = vcmask 1043456
    %v94 = vsel %vm93, %v86, 0.0
    %v95 = vadd.f32 %v92, %v94
    %v96 = vrot.slane %v95, 4
    %v97 = vadd.f32 %v95, %v96
    %v98 = vrot.slane %v97, 2
    %v99 = vadd.f32 %v97, %v98
    %v100 = vrot.slane %v99, 1
    %v101 = vadd.f32 %v99, %v100
    %p102 = scmp.eq.s32.totalorder 0, 0
    // Predicated region
    $region22: #{tpu_custom_call.1} parent=1 // pred_check
      %p103 = pneg %p102
    $region23: #{tpu_custom_call.1} parent=1 // pred_check_branch
      %105 = sbr.rel (%p103) target = $region25
    $region24: #{tpu_custom_call.1} parent=1 // pred_region
      %106 = vst [vmem:[#allocation2] sm:$0x1] %v101
    $region25: #{tpu_custom_call.1} parent=1 // pred_fallthru
      _
    %p107 = scmp.ne.s32.totalorder 0, 0
    // Predicated region
    $region26: #{tpu_custom_call.1} parent=1 // pred_check
      %p108 = pneg %p107
    $region27: #{tpu_custom_call.1} parent=1 // pred_check_branch
      %110 = sbr.rel (%p108) target = $region29
    $region28: #{tpu_custom_call.1} parent=1 // pred_region
      %v111 = vld [vmem:[#allocation2] sm:$0x1]
      %v112 = vadd.f32 %v111, %v101
      %113 = vst [vmem:[#allocation2] sm:$0x1] %v112
    $region29: #{tpu_custom_call.1} parent=1 // pred_fallthru
      _
    // Predicated region
    $region30: #{tpu_custom_call.1} parent=1 // pred_check
      %p114 = pneg %p102
    $region31: #{tpu_custom_call.1} parent=1 // pred_check_branch
      %116 = sbr.rel (%p114) target = $region33
    $region32: #{tpu_custom_call.1} parent=1 // pred_region
      %v117 = vld [vmem:[#allocation2] sm:$0x1]
      %v118 = vld [vmem:[%s2] sm:$0x1]
      %v119 = vmul.f32 %v117, %v118
      %vm120 = vcmask 1040384
      %v121 = vsel %vm120, %v119, 0.0
      %122 = vadd.xlane.f32.xlu0 %v121
      %v123 = vpop.xlane.xlu0 %122
      %v124 = vrot.slane %v123, 4
      %v125 = vadd.f32 %v123, %v124
      %v126 = vrot.slane %v125, 2
      %v127 = vadd.f32 %v125, %v126
      %v128 = vrot.slane %v127, 1
      %v129 = vadd.f32 %v127, %v128
      %s130 = vtos %v129
      %v131 = vstv %s130
      %vm132 = vcmask 0
      %133 = vst.msk [vmem:[#allocation8] sm:$0x1] %vm132, %v131
    $region33: #{tpu_custom_call.1} parent=1 // pred_fallthru
      _
    // Predicated region
    $region34: #{tpu_custom_call.1} parent=1 // pred_check
      _
    $region35: #{tpu_custom_call.1} parent=1 // pred_check_branch
      %135 = sbr.rel (0) target = $region37
    $region36: #{tpu_custom_call.1} parent=1 // pred_region
      %s137 = ssub.s32 16, 16
      %138 = vsyncadd [#allocation5], %s137
      %s140 = sshll.u32 [#allocation8], 4
      %s141 = int_to_ptr.vmem [resolvable:$true] %s140
      %143 = dma.vmem_to_hbm [thread:$0]  %s141, 16, %s3, [#allocation5]
    $region37: #{tpu_custom_call.1} parent=1 // pred_fallthru
      _
    // Predicated region
    $region38: #{tpu_custom_call.1} parent=1 // pred_check
      _
    $region39: #{tpu_custom_call.1} parent=1 // pred_check_branch
      %145 = sbr.rel (0) target = $region41
    $region40: #{tpu_custom_call.1} parent=1 // pred_region
      %146 = dma.done [#allocation5], 16
    $region41: #{tpu_custom_call.1} parent=1 // pred_fallthru
      _
    %147 = vsyncpa [#allocation4], 1
    %148 = vsyncpa [#allocation7], 1
    %149 = vsyncpa [#allocation5], 1

</llo_original>
